<compile_context>
chip_gen: v6e
topology: v6e:2x2x1
jax: 0.10.0
libtpu: 0.0.40
codegen_flags: <defaults>
</compile_context>

<pallas_src>
import functools
import math

import jax
import jax.numpy as jnp
from jax.experimental import pallas as pl
from jax.experimental.pallas import tpu as pltpu


# ---------------------------------------------------------------------------
# Fused Q/K/V projection kernel (torch nn.Linear convention, weights pre-transposed):
#   y = x @ W_qkv_t + b_qkv   with W_qkv_t = concat([Wq, Wk, Wv], 0).T  -> (E, 3E)
#   q = relu(y[:, :E]); k = relu(y[:, E:2E]); v = y[:, 2E:]
# ---------------------------------------------------------------------------
def _qkv_proj_kernel(x_ref, w_ref, b_ref, q_ref, k_ref, v_ref, *, e):
    y = jnp.dot(x_ref[...], w_ref[...], preferred_element_type=jnp.float32)
    y = y + b_ref[...]
    q_ref[...] = jnp.maximum(y[:, :e], 0.0).astype(q_ref.dtype)
    k_ref[...] = jnp.maximum(y[:, e:2 * e], 0.0).astype(k_ref.dtype)
    v_ref[...] = y[:, 2 * e:].astype(v_ref.dtype)


def _qkv_projection(x2d, w_qkv_t, b_qkv, e, tile_m):
    m = x2d.shape[0]
    out_sds = jax.ShapeDtypeStruct((m, e), jnp.float32)
    return pl.pallas_call(
        functools.partial(_qkv_proj_kernel, e=e),
        out_shape=(out_sds, out_sds, out_sds),
        grid=(pl.cdiv(m, tile_m),),
        in_specs=[
            pl.BlockSpec((tile_m, e), lambda i: (i, 0)),
            pl.BlockSpec((e, 3 * e), lambda i: (0, 0)),   # resident across the grid
            pl.BlockSpec((1, 3 * e), lambda i: (0, 0)),
        ],
        out_specs=(
            pl.BlockSpec((tile_m, e), lambda i: (i, 0)),
            pl.BlockSpec((tile_m, e), lambda i: (i, 0)),
            pl.BlockSpec((tile_m, e), lambda i: (i, 0)),
        ),
        compiler_params=pltpu.CompilerParams(
            dimension_semantics=("parallel",),
            vmem_limit_bytes=48 * 1024 * 1024,
        ),
    )(x2d, w_qkv_t, b_qkv)


# ---------------------------------------------------------------------------
# Cosformer linear-attention core (non-causal) + fused output projection.
# One grid step = one batch element, all heads processed, lane-dense (1, L, E) output.
# Per head h:
#   q2 = [q_h*sin, q_h*cos]  (L, 2hd),  k2 = [k_h*sin, k_h*cos] (S, 2hd), k masked
#   kv = k2^T v_h (2hd, hd);  denom = q2 . sum_s(k2)  clamped at eps
#   out_h = (q2 kv) / denom
# Then out = concat_h(out_h) @ Wo_t + bo.
# ---------------------------------------------------------------------------
def _attn_outproj_kernel(keep_ref, q_ref, k_ref, v_ref, wo_ref, bo_ref, o_ref,
                         *, num_heads, head_dim, m_scale, eps):
    q = q_ref[0]          # (L, E)
    k = k_ref[0]          # (S, E)
    v = v_ref[0]          # (S, E)
    keep = keep_ref[0]    # (S, 1), 1.0 where key is valid

    tgt_len = q.shape[0]
    src_len = k.shape[0]

    # cos/sin re-weighting computed in-kernel (EUP), matching
    # sin/cos(pi/2 * i / m) for i = 1..len.
    scale = (math.pi / 2.0) / m_scale
    idx_q = (jax.lax.broadcasted_iota(jnp.float32, (tgt_len, 1), 0) + 1.0) * scale
    idx_k = (jax.lax.broadcasted_iota(jnp.float32, (src_len, 1), 0) + 1.0) * scale
    sin_q, cos_q = jnp.sin(idx_q), jnp.cos(idx_q)
    sin_k, cos_k = jnp.sin(idx_k), jnp.cos(idx_k)

    k = k * keep          # zero padded key rows for all heads at once

    outs = []
    for h in range(num_heads):          # static unroll; H is small
        lo = h * head_dim
        hi = lo + head_dim
        qh = q[:, lo:hi]                # (L, hd)
        kh = k[:, lo:hi]                # (S, hd)
        vh = v[:, lo:hi]                # (S, hd)

        # Concatenated sin/cos halves -> single 2*hd-wide contractions.
        q2 = jnp.concatenate([qh * sin_q, qh * cos_q], axis=-1)   # (L, 2hd)
        k2 = jnp.concatenate([kh * sin_k, kh * cos_k], axis=-1)   # (S, 2hd)

        kv = jax.lax.dot_general(k2, vh, (((0,), (0,)), ((), ())),
                                 preferred_element_type=jnp.float32)   # (2hd, hd)
        ksum = jnp.sum(k2, axis=0, keepdims=True)                      # (1, 2hd)
        denom = jnp.sum(q2 * ksum, axis=-1, keepdims=True)             # (L, 1)
        z = pl.reciprocal(jnp.maximum(denom, eps), approx=False)

        outs.append(jnp.dot(q2, kv, preferred_element_type=jnp.float32) * z)

    attn = jnp.concatenate(outs, axis=-1)                              # (L, E)
    out = jnp.dot(attn, wo_ref[...], preferred_element_type=jnp.float32) + bo_ref[...]
    o_ref[0] = out.astype(o_ref.dtype)


# ---------------------------------------------------------------------------
# Full forward (self-attention: key = value = query), non-causal, has_outproj=True,
# act_fun='relu'. Dropout is defined but never applied in the reference forward.
# Public layout is batch-first (B, L, E) like the PyTorch forward's input/output.
# ---------------------------------------------------------------------------
def cosformer_attention(params, query, key_padding_mask, num_heads, eps=1e-6):
    B, L, E = query.shape
    S = L
    H = num_heads
    hd = E // H
    out_dtype = query.dtype

    # One-time weight layout plumbing (outside the kernels): stack + pre-transpose so
    # kernels compute x @ W directly, no in-kernel transpose.
    w_qkv_t = jnp.concatenate(
        [params["wq"], params["wk"], params["wv"]], axis=0).astype(jnp.float32).T   # (E, 3E)
    b_qkv = jnp.concatenate(
        [params["bq"], params["bk"], params["bv"]], axis=-1).astype(jnp.float32)    # (1, 3E)
    wo_t = params["wo"].astype(jnp.float32).T                                       # (E, E)
    bo = params["bo"].astype(jnp.float32)                                           # (1, E)

    # Projections are row-order agnostic: stay in (B, L, E) order, no transposes.
    x2d = query.reshape(B * L, E)
    if x2d.dtype != jnp.float32:
        x2d = x2d.astype(jnp.float32)

    m_rows = B * L
    tile_m = m_rows if m_rows <= 512 else 512
    q2d, k2d, v2d = _qkv_projection(x2d, w_qkv_t, b_qkv, E, tile_m)
    qh = q2d.reshape(B, L, E)   # free reshapes (contiguous)
    kh = k2d.reshape(B, L, E)
    vh = v2d.reshape(B, L, E)

    # 1.0 where the key is valid, 0.0 where padded.
    keep = (1.0 - key_padding_mask.astype(jnp.float32)).reshape(B, S, 1)

    out = pl.pallas_call(
        functools.partial(_attn_outproj_kernel, num_heads=H, head_dim=hd,
                          m_scale=float(max(L, S)), eps=eps),
        out_shape=jax.ShapeDtypeStruct((B, L, E), out_dtype),
        grid=(B,),
        in_specs=[
            pl.BlockSpec((1, S, 1), lambda b: (b, 0, 0)),
            pl.BlockSpec((1, L, E), lambda b: (b, 0, 0)),
            pl.BlockSpec((1, S, E), lambda b: (b, 0, 0)),
            pl.BlockSpec((1, S, E), lambda b: (b, 0, 0)),
            pl.BlockSpec((E, E), lambda b: (0, 0)),      # Wo_t resident across the grid
            pl.BlockSpec((1, E), lambda b: (0, 0)),
        ],
        out_specs=pl.BlockSpec((1, L, E), lambda b: (b, 0, 0)),
        compiler_params=pltpu.CompilerParams(
            dimension_semantics=("parallel",),
            vmem_limit_bytes=48 * 1024 * 1024,
        ),
    )(keep, qh, kh, vh, wo_t, bo)
    return out


# ---------------------------------------------------------------------------
# Pure-JAX reference mirroring the PyTorch math (for validation).
# ---------------------------------------------------------------------------
def cosformer_reference(params, query, key_padding_mask, num_heads, eps=1e-6):
    B, L, E = query.shape
    S = L
    H = num_heads
    hd = E // H
    x = jnp.transpose(query.astype(jnp.float32), (1, 0, 2))  # (L, B, E)
    q = jax.nn.relu(x @ params["wq"].T + params["bq"][0])
    k = jax.nn.relu(x @ params["wk"].T + params["bk"][0])
    v = x @ params["wv"].T + params["bv"][0]

    def to_heads(t):
        return t.reshape(L, B * H, hd).transpose(1, 0, 2)

    qh, kh, vh = to_heads(q), to_heads(k), to_heads(v)
    m = max(S, L)
    idx = (jnp.pi / 2.0) * jnp.arange(1, m + 1, dtype=jnp.float32).reshape(1, -1, 1) / m
    q_ = jnp.concatenate([qh * jnp.sin(idx[:, :L]), qh * jnp.cos(idx[:, :L])], axis=-1)
    k_ = jnp.concatenate([kh * jnp.sin(idx[:, :S]), kh * jnp.cos(idx[:, :S])], axis=-1)
    mask = jnp.repeat(key_padding_mask, H, axis=0)  # (B*H, S)
    k_ = jnp.where(mask[:, :, None], 0.0, k_)
    kv_ = jnp.einsum("nld,nlm->ndm", k_, vh)
    z_ = 1.0 / jnp.maximum(jnp.einsum("nld,nd->nl", q_, jnp.sum(k_, axis=1)), eps)
    out = jnp.einsum("nld,ndm,nl->nlm", q_, kv_, z_)
    out = out.transpose(1, 0, 2).reshape(L, B, E)
    out = out @ params["wo"].T + params["bo"][0]
    return jnp.transpose(out, (1, 0, 2))


if __name__ == "__main__":
    B, L, E, H = 2, 8, 32, 4  # batch, seq, embed_dim, num_heads (head_dim = 8)

    root = jax.random.PRNGKey(0)
    ks = jax.random.split(root, 9)
    params = {
        "wq": 0.1 * jax.random.normal(ks[0], (E, E), jnp.float32),
        "bq": 0.1 * jax.random.normal(ks[1], (1, E), jnp.float32),
        "wk": 0.1 * jax.random.normal(ks[2], (E, E), jnp.float32),
        "bk": 0.1 * jax.random.normal(ks[3], (1, E), jnp.float32),
        "wv": 0.1 * jax.random.normal(ks[4], (E, E), jnp.float32),
        "bv": 0.1 * jax.random.normal(ks[5], (1, E), jnp.float32),
        "wo": 0.1 * jax.random.normal(ks[6], (E, E), jnp.float32),
        "bo": 0.1 * jax.random.normal(ks[7], (1, E), jnp.float32),
    }
    query = jax.random.normal(ks[8], (B, L, E), jnp.float32)
    # True = padded key position (last two keys of batch 1 are padding)
    key_padding_mask = jnp.zeros((B, L), dtype=bool).at[1, -2:].set(True)

    out = cosformer_attention(params, query, key_padding_mask, H)
    out = jax.block_until_ready(out)

    ref = cosformer_reference(params, query, key_padding_mask, H)
    assert out.shape == (B, L, E)
    assert out.dtype == query.dtype
    assert jnp.allclose(out, ref, atol=1e-4, rtol=1e-4), "mismatch vs reference"

    print("KERNEL_OK")
</pallas_src>

<mosaic_0001>
module attributes {stable_mosaic.version = 11 : i64} {
  func.func @_qkv_proj_kernel(%arg0: i32, %arg1: memref<16x32xf32, #tpu.memory_space<vmem>>, %arg2: memref<32x96xf32, #tpu.memory_space<vmem>>, %arg3: memref<1x96xf32, #tpu.memory_space<vmem>>, %arg4: memref<16x32xf32, #tpu.memory_space<vmem>>, %arg5: memref<16x32xf32, #tpu.memory_space<vmem>>, %arg6: memref<16x32xf32, #tpu.memory_space<vmem>>) attributes {dimension_semantics = [#tpu.dimension_semantics<parallel>], iteration_bounds = array<i64: 1>, scalar_prefetch = 0 : i64, scratch_operands = 0 : i64, tpu.core_type = #tpu.core_type<tc>, window_params = [{transform_indices = @transform_0, window_bounds = array<i64: 16, 32>}, {pipeline_mode = #tpu.pipeline_mode<synchronous>, transform_indices = @transform_1, window_bounds = array<i64: 32, 96>}, {pipeline_mode = #tpu.pipeline_mode<synchronous>, transform_indices = @transform_2, window_bounds = array<i64: 1, 96>}, {transform_indices = @transform_3, window_bounds = array<i64: 16, 32>}, {transform_indices = @transform_4, window_bounds = array<i64: 16, 32>}, {transform_indices = @transform_5, window_bounds = array<i64: 16, 32>}]} {
    %c0 = arith.constant 0 : index
    %c0_0 = arith.constant 0 : index
    %0 = vector.load %arg1[%c0, %c0_0] : memref<16x32xf32, #tpu.memory_space<vmem>>, vector<16x32xf32>
    %c0_1 = arith.constant 0 : index
    %c0_2 = arith.constant 0 : index
    %1 = vector.load %arg2[%c0_1, %c0_2] : memref<32x96xf32, #tpu.memory_space<vmem>>, vector<32x96xf32>
    %cst = arith.constant dense<0.000000e+00> : vector<16x96xf32>
    %2 = tpu.matmul %0, %1, %cst {dimension_numbers = #tpu.dot_dimension_numbers<[1], [0], [0], [1], [0, 0, 1, 1], [], []>} : vector<16x32xf32>, vector<32x96xf32>, vector<16x96xf32> -> vector<16x96xf32>
    %c0_3 = arith.constant 0 : index
    %c0_4 = arith.constant 0 : index
    %3 = vector.load %arg3[%c0_3, %c0_4] : memref<1x96xf32, #tpu.memory_space<vmem>>, vector<1x96xf32>
    %4 = vector.broadcast %3 : vector<1x96xf32> to vector<16x96xf32>
    %5 = arith.addf %2, %4 : vector<16x96xf32>
    %6 = vector.extract_strided_slice %5 {offsets = [0, 0], sizes = [16, 32], strides = [1, 1]} : vector<16x96xf32> to vector<16x32xf32>
    %cst_5 = arith.constant 0.000000e+00 : f32
    %7 = vector.broadcast %cst_5 : f32 to vector<16x32xf32>
    %8 = arith.maximumf %6, %7 : vector<16x32xf32>
    %c0_6 = arith.constant 0 : index
    %c0_7 = arith.constant 0 : index
    %9 = vector.load %arg4[%c0_6, %c0_7] : memref<16x32xf32, #tpu.memory_space<vmem>>, vector<16x32xf32>
    tpu.vector_store %arg4[%c0_6, %c0_7], %8 {strides = array<i32>} : memref<16x32xf32, #tpu.memory_space<vmem>>, vector<16x32xf32>,
    %10 = vector.extract_strided_slice %5 {offsets = [0, 32], sizes = [16, 32], strides = [1, 1]} : vector<16x96xf32> to vector<16x32xf32>
    %cst_8 = arith.constant 0.000000e+00 : f32
    %11 = vector.broadcast %cst_8 : f32 to vector<16x32xf32>
    %12 = arith.maximumf %10, %11 : vector<16x32xf32>
    %c0_9 = arith.constant 0 : index
    %c0_10 = arith.constant 0 : index
    %13 = vector.load %arg5[%c0_9, %c0_10] : memref<16x32xf32, #tpu.memory_space<vmem>>, vector<16x32xf32>
    tpu.vector_store %arg5[%c0_9, %c0_10], %12 {strides = array<i32>} : memref<16x32xf32, #tpu.memory_space<vmem>>, vector<16x32xf32>,
    %14 = vector.extract_strided_slice %5 {offsets = [0, 64], sizes = [16, 32], strides = [1, 1]} : vector<16x96xf32> to vector<16x32xf32>
    %c0_11 = arith.constant 0 : index
    %c0_12 = arith.constant 0 : index
    %15 = vector.load %arg6[%c0_11, %c0_12] : memref<16x32xf32, #tpu.memory_space<vmem>>, vector<16x32xf32>
    tpu.vector_store %arg6[%c0_11, %c0_12], %14 {strides = array<i32>} : memref<16x32xf32, #tpu.memory_space<vmem>>, vector<16x32xf32>,
    return
  }
  func.func @transform_0(%arg0: i32) -> (i32, i32) {
    %c0_i32 = arith.constant 0 : i32
    %c0_i32_0 = arith.constant 0 : i32
    return %arg0, %c0_i32 : i32, i32
  }
  func.func @transform_1(%arg0: i32) -> (i32, i32) {
    %c0_i32 = arith.constant 0 : i32
    %c0_i32_0 = arith.constant 0 : i32
    %c0_i32_1 = arith.constant 0 : i32
    return %c0_i32, %c0_i32_0 : i32, i32
  }
  func.func @transform_2(%arg0: i32) -> (i32, i32) {
    %c0_i32 = arith.constant 0 : i32
    %c0_i32_0 = arith.constant 0 : i32
    %c0_i32_1 = arith.constant 0 : i32
    return %c0_i32, %c0_i32_0 : i32, i32
  }
  func.func @transform_3(%arg0: i32) -> (i32, i32) {
    %c0_i32 = arith.constant 0 : i32
    %c0_i32_0 = arith.constant 0 : i32
    return %arg0, %c0_i32 : i32, i32
  }
  func.func @transform_4(%arg0: i32) -> (i32, i32) {
    %c0_i32 = arith.constant 0 : i32
    %c0_i32_0 = arith.constant 0 : i32
    return %arg0, %c0_i32 : i32, i32
  }
  func.func @transform_5(%arg0: i32) -> (i32, i32) {
    %c0_i32 = arith.constant 0 : i32
    %c0_i32_0 = arith.constant 0 : i32
    return %arg0, %c0_i32 : i32, i32
  }
}

</mosaic_0001>

<llo_original>
// kernel: tpu_custom_call.1
$region0: #{tpu_custom_call.1}
  #allocation0 [shape = 'u32[]', space=smem, size = 0x4, offset = 0x4, fixed_abs, tag = 'smem constant byte address 0x4 - core index']
  #allocation1 [shape = 'u32[144,128]{1,0:T(1,128)}', space=vmem, size = 0x12000, scoped, tag = 'internal scratch']
  %s0 = inlined_call_operand.hbm [shape: f32[16,32], index: 0, kind: input, shape index: {}]
  %s1 = inlined_call_operand.hbm [shape: f32[32,96], index: 1, kind: input, shape index: {}]
  %s2 = inlined_call_operand.vmem [shape: f32[1,96], index: 2, kind: input, shape index: {}]
  %s3 = inlined_call_operand.hbm [shape: f32[16,32], index: 3, kind: output, shape index: {0}]
  %s4 = inlined_call_operand.hbm [shape: f32[16,32], index: 4, kind: output, shape index: {1}]
  %s5 = inlined_call_operand.hbm [shape: f32[16,32], index: 5, kind: output, shape index: {2}]
  %6 = xla_tuple %s3, %s4, %s5
  %s7 = sld [smem:[#allocation0]]
  $region46: #{tpu_custom_call.1} parent=0
    _
  %s9 = ssub.s32 1, %s7
  %s10 = scalar_select 0, %s9, %s7
  $region1: #{tpu_custom_call.1} parent=0
    #allocation2 [shape = 'u8[8192]{0}', space=vmem, size = 0x2000, scoped, tag = 'input window, operand 0, single buffered']
    #allocation3 [shape = 's32[1]{0}', space=sflag, size = 0x4, scoped, tag = 'scoped memory for tpu_custom_call.1']
    #allocation4 [shape = 's32[1]{0}', space=sflag, size = 0x4, scoped, tag = 'scoped memory for tpu_custom_call.1']
    #allocation5 [shape = 'u8[16384]{0}', space=vmem, size = 0x4000, scoped, tag = 'input window, operand 1, single buffered']
    #allocation6 [shape = 's32[1]{0}', space=sflag, size = 0x4, scoped, tag = 'scoped memory for tpu_custom_call.1']
    #allocation7 [shape = 'u8[8192]{0}', space=vmem, size = 0x2000, scoped, tag = 'output window, operand 0, single buffered']
    #allocation8 [shape = 'u8[8192]{0}', space=vmem, size = 0x2000, scoped, tag = 'output window, operand 1, single buffered']
    #allocation9 [shape = 's32[1]{0}', space=sflag, size = 0x4, scoped, tag = 'scoped memory for tpu_custom_call.1']
    #allocation10 [shape = 'u8[8192]{0}', space=vmem, size = 0x2000, scoped, tag = 'output window, operand 2, single buffered']
    %11 = vsyncpa [#allocation3], 0
    %12 = vsyncpa [#allocation6], 0
    %13 = vsyncpa [#allocation4], 0
    %14 = vsyncpa [#allocation9], 0
    // Predicated region
    $region2: #{tpu_custom_call.1} parent=1 // pred_check
      _
    $region3: #{tpu_custom_call.1} parent=1 // pred_check_branch
      %16 = sbr.rel (0) target = $region5
    $region4: #{tpu_custom_call.1} parent=1 // pred_region
      %s18 = ssub.s32 256, 256
      %19 = vsyncadd [#allocation3], %s18
      %s20 = sshll.u32 [#allocation2], 4
      %s21 = int_to_ptr.vmem [resolvable:$true] %s20
      %26 = dma.hbm_to_vmem [thread:$0]  %s0, 256, %s21, [#allocation3], 128, 128, 8
    $region5: #{tpu_custom_call.1} parent=1 // pred_fallthru
      _
    // Predicated region
    $region6: #{tpu_custom_call.1} parent=1 // pred_check
      _
    $region7: #{tpu_custom_call.1} parent=1 // pred_check_branch
      %28 = sbr.rel (0) target = $region9
    $region8: #{tpu_custom_call.1} parent=1 // pred_region
      %s30 = ssub.s32 512, 512
      %31 = vsyncadd [#allocation6], %s30
      %s32 = sshll.u32 [#allocation5], 4
      %s33 = int_to_ptr.vmem [resolvable:$true] %s32
      %38 = dma.hbm_to_vmem [thread:$0]  %s1, 512, %s33, [#allocation6], 128, 128, 8
    $region9: #{tpu_custom_call.1} parent=1 // pred_fallthru
      _
    // Predicated region
    $region10: #{tpu_custom_call.1} parent=1 // pred_check
      _
    $region11: #{tpu_custom_call.1} parent=1 // pred_check_branch
      %40 = sbr.rel (0) target = $region13
    $region12: #{tpu_custom_call.1} parent=1 // pred_region
      _
    $region13: #{tpu_custom_call.1} parent=1 // pred_fallthru
      _
    // Predicated region
    $region14: #{tpu_custom_call.1} parent=1 // pred_check
      _
    $region15: #{tpu_custom_call.1} parent=1 // pred_check_branch
      %42 = sbr.rel (0) target = $region17
    $region16: #{tpu_custom_call.1} parent=1 // pred_region
      %43 = dma.done [#allocation3], 256
    $region17: #{tpu_custom_call.1} parent=1 // pred_fallthru
      _
    // Predicated region
    $region18: #{tpu_custom_call.1} parent=1 // pred_check
      _
    $region19: #{tpu_custom_call.1} parent=1 // pred_check_branch
      %45 = sbr.rel (0) target = $region21
    $region20: #{tpu_custom_call.1} parent=1 // pred_region
      %46 = dma.done [#allocation6], 512
    $region21: #{tpu_custom_call.1} parent=1 // pred_fallthru
      _
    %v47 = vld [vmem:[#allocation2] sm:$0xff]
    %v48 = vld [vmem:[#allocation2 + $0x8] sm:$0xff]
    %v49 = vld [vmem:[#allocation5] sm:$0xff]
    %v50 = vld [vmem:[#allocation5 + $0x8] sm:$0xff]
    %v51 = vld [vmem:[#allocation5 + $0x10] sm:$0xff]
    %v52 = vld [vmem:[#allocation5 + $0x18] sm:$0xff]
    %v53 = vld [vmem:[%s2] sm:$0x1]
    %v55 = vlaneseq
    %v56 = vshrl.u32 %v55, 7
    %v57 = vsub.s32 0, %v56
    %v58 = vrot.slane %v53, %v57
    %vm60 = vcmask 261120
    %v62 = vsel %vm60, %v47, 0
    %v65 = vsel %vm60, %v48, 0
    %67 = vmatprep.subr.mxu0 0.0
    %68 = vmatpush1.msra.mxu0 0.0
    %69 = vmatprep.subr.mxu0 0.0
    %70 = vmatpush1.msra.mxu0 0.0
    %71 = vmatprep.subr.mxu0 0.0
    %72 = vmatpush1.msra.mxu0 0.0
    %73 = vmatprep.subr.mxu0 0.0
    %74 = vmatpush1.msra.mxu0 0.0
    %75 = vmatprep.subr.mxu0 0.0
    %76 = vmatpush1.msra.mxu0 0.0
    %77 = vmatprep.subr.mxu0 0.0
    %78 = vmatpush1.msra.mxu0 0.0
    %79 = vmatprep.subr.mxu0 0.0
    %80 = vmatpush1.msra.mxu0 0.0
    %81 = vmatprep.subr.mxu0 0.0
    %82 = vmatpush1.msra.mxu0 0.0
    %83 = vmatprep.subr.mxu0 0.0
    %84 = vmatpush1.msra.mxu0 0.0
    %85 = vmatprep.subr.mxu0 0.0
    %86 = vmatpush1.msra.mxu0 0.0
    %87 = vmatprep.subr.mxu0 0.0
    %88 = vmatpush1.msra.mxu0 0.0
    %89 = vmatprep.subr.mxu0 0.0
    %90 = vmatpush1.msra.mxu0 0.0
    %91 = vmatprep.subr.mxu0 0.0
    %92 = vmatpush1.msra.mxu0 %v52
    %93 = vmatprep.subr.mxu0 0.0
    %94 = vmatpush1.msra.mxu0 %v51
    %95 = vmatprep.subr.mxu0 0.0
    %96 = vmatpush1.msra.mxu0 %v50
    %97 = vmatprep.subr.mxu0 0.0
    %98 = vmatpush1.msra.mxu0 %v49
    %99 = vmatprep.subr.mxu0 0.0
    %100 = vmatpush2.msra.mxu0 0.0
    %101 = vmatprep.subr.mxu0 0.0
    %102 = vmatpush2.msra.mxu0 0.0
    %103 = vmatprep.subr.mxu0 0.0
    %104 = vmatpush2.msra.mxu0 0.0
    %105 = vmatprep.subr.mxu0 0.0
    %106 = vmatpush2.msra.mxu0 0.0
    %107 = vmatprep.subr.mxu0 0.0
    %108 = vmatpush2.msra.mxu0 0.0
    %109 = vmatprep.subr.mxu0 0.0
    %110 = vmatpush2.msra.mxu0 0.0
    %111 = vmatprep.subr.mxu0 0.0
    %112 = vmatpush2.msra.mxu0 0.0
    %113 = vmatprep.subr.mxu0 0.0
    %114 = vmatpush2.msra.mxu0 0.0
    %115 = vmatprep.subr.mxu0 0.0
    %116 = vmatpush2.msra.mxu0 0.0
    %117 = vmatprep.subr.mxu0 0.0
    %118 = vmatpush2.msra.mxu0 0.0
    %119 = vmatprep.subr.mxu0 0.0
    %120 = vmatpush2.msra.mxu0 0.0
    %121 = vmatprep.subr.mxu0 0.0
    %122 = vmatpush2.msra.mxu0 0.0
    %123 = vmatprep.subr.mxu0 0.0
    %124 = vmatpush2.msra.mxu0 0.0
    %125 = vmatprep.subr.mxu0 0.0
    %126 = vmatpush2.msra.mxu0 0.0
    %127 = vmatprep.subr.mxu0 0.0
    %128 = vmatpush2.msra.mxu0 0.0
    %129 = vmatprep.subr.mxu0 0.0
    %130 = vmatpush2.msra.mxu0 0.0
    %131 = vmatprep.mubr.f32.mxu0 0.0
    %132 = vmatmul.mubr.f32.gmra.mxu0 %v62
    %v133 = vpop.f32.mrf.mxu0
    %v134 = vadd.f32 %v58, %v133
    %v135 = vpop.f32.mrf.mxu0
    %136 = vmatprep.mubr.f32.mxu0 0.0
    %137 = vmatmul.mubr.f32.gmra.mxu0 %v65
    %v138 = vpop.f32.mrf.mxu0
    %v139 = vadd.f32 %v58, %v138
    %v140 = vpop.f32.mrf.mxu0
    %141 = vdwg.mxu0
    %v142 = vmax.f32 %v134, 0.0
    %v143 = vmax.f32 %v139, 0.0
    %144 = vst.msk [vmem:[#allocation7] sm:$0xff] %vm60, %v142
    %145 = vst.msk [vmem:[#allocation7 + $0x8] sm:$0xff] %vm60, %v143
    %148 = vrot.lane.b32.xlu0 %v142, 96
    %v149 = vpop.permute.xlu0 %148
    %150 = vrot.lane.b32.xlu0 %v143, 96
    %v151 = vpop.permute.xlu0 %150
    %154 = vst.msk [vmem:[#allocation8] sm:$0xff] %vm60, %v149
    %155 = vst.msk [vmem:[#allocation8 + $0x8] sm:$0xff] %vm60, %v151
    %158 = vrot.lane.b32.xlu0 %v134, 64
    %v159 = vpop.permute.xlu0 %158
    %160 = vrot.lane.b32.xlu0 %v139, 64
    %v161 = vpop.permute.xlu0 %160
    %164 = vst.msk [vmem:[#allocation10] sm:$0xff] %vm60, %v159
    %165 = vst.msk [vmem:[#allocation10 + $0x8] sm:$0xff] %vm60, %v161
    // Predicated region
    $region22: #{tpu_custom_call.1} parent=1 // pred_check
      _
    $region23: #{tpu_custom_call.1} parent=1 // pred_check_branch
      %167 = sbr.rel (0) target = $region25
    $region24: #{tpu_custom_call.1} parent=1 // pred_region
      %s169 = ssub.s32 256, 256
      %170 = vsyncadd [#allocation4], %s169
      %s171 = sshll.u32 [#allocation7], 4
      %s172 = int_to_ptr.vmem [resolvable:$true] %s171
      %177 = dma.vmem_to_hbm [thread:$0]  %s172, 256, %s3, [#allocation4], 128, 128, 8
    $region25: #{tpu_custom_call.1} parent=1 // pred_fallthru
      _
    // Predicated region
    $region26: #{tpu_custom_call.1} parent=1 // pred_check
      _
    $region27: #{tpu_custom_call.1} parent=1 // pred_check_branch
      %179 = sbr.rel (0) target = $region29
    $region28: #{tpu_custom_call.1} parent=1 // pred_region
      %s181 = ssub.s32 256, 256
      %182 = vsyncadd [#allocation9], %s181
      %s183 = sshll.u32 [#allocation8], 4
      %s184 = int_to_ptr.vmem [resolvable:$true] %s183
      %189 = dma.vmem_to_hbm [thread:$0]  %s184, 256, %s4, [#allocation9], 128, 128, 8
    $region29: #{tpu_custom_call.1} parent=1 // pred_fallthru
      _
    // Predicated region
    $region30: #{tpu_custom_call.1} parent=1 // pred_check
      _
    $region31: #{tpu_custom_call.1} parent=1 // pred_check_branch
      %191 = sbr.rel (0) target = $region33
    $region32: #{tpu_custom_call.1} parent=1 // pred_region
      %s193 = ssub.s32 256, 256
      %194 = vsyncadd [#allocation9], %s193
      %s195 = sshll.u32 [#allocation10], 4
      %s196 = int_to_ptr.vmem [resolvable:$true] %s195
      %201 = dma.vmem_to_hbm [thread:$0]  %s196, 256, %s5, [#allocation9], 128, 128, 8
    $region33: #{tpu_custom_call.1} parent=1 // pred_fallthru
      _
    // Predicated region
    $region34: #{tpu_custom_call.1} parent=1 // pred_check
      _
    $region35: #{tpu_custom_call.1} parent=1 // pred_check_branch
      %203 = sbr.rel (0) target = $region37
    $region36: #{tpu_custom_call.1} parent=1 // pred_region
      %204 = dma.done [#allocation4], 256
    $region37: #{tpu_custom_call.1} parent=1 // pred_fallthru
      _
    // Predicated region
    $region38: #{tpu_custom_call.1} parent=1 // pred_check
      _
    $region39: #{tpu_custom_call.1} parent=1 // pred_check_branch
      %206 = sbr.rel (0) target = $region41
    $region40: #{tpu_custom_call.1} parent=1 // pred_region
      %207 = dma.done [#allocation9], 256
    $region41: #{tpu_custom_call.1} parent=1 // pred_fallthru
      _
    // Predicated region
    $region42: #{tpu_custom_call.1} parent=1 // pred_check
      _
    $region43: #{tpu_custom_call.1} parent=1 // pred_check_branch
      %209 = sbr.rel (0) target = $region45
    $region44: #{tpu_custom_call.1} parent=1 // pred_region
      %210 = dma.done [#allocation9], 256
    $region45: #{tpu_custom_call.1} parent=1 // pred_fallthru
      _
    %211 = vsyncpa [#allocation3], 1
    %212 = vsyncpa [#allocation6], 1
    %213 = vsyncpa [#allocation4], 1
    %214 = vsyncpa [#allocation9], 1

</llo_original>
